<compile_context>
chip_gen: v6e
topology: v6e:2x2x1
jax: 0.10.0
libtpu: 0.0.40
codegen_flags: <defaults>
</compile_context>

<pallas_src>
import jax
import jax.numpy as jnp
from jax.experimental import pallas as pl
from jax.experimental.pallas import tpu as pltpu


def _round_up(x, m):
    return ((x + m - 1) // m) * m


def _pad2d(a, rows, cols):
    pr, pc = rows - a.shape[0], cols - a.shape[1]
    if pr == 0 and pc == 0:
        return a
    return jnp.pad(a, ((0, pr), (0, pc)))


def _spec(shape, index_map, buffers=None):
    """BlockSpec with an optional multi-buffering hint.

    Falls back to a plain BlockSpec if this JAX build does not accept
    `pipeline_mode=` (keeps the script runnable everywhere)."""
    if buffers is not None:
        try:
            return pl.BlockSpec(shape, index_map,
                                pipeline_mode=pl.Buffered(buffers))
        except Exception:  # pragma: no cover - older JAX
            pass
    return pl.BlockSpec(shape, index_map)


def _resident_spec(shape):
    """Operand with a constant index_map: stays in VMEM across all grid
    steps, single-buffered (Pallas double-buffers by default)."""
    return _spec(shape, lambda *_: (0,) * len(shape), buffers=1)


def _vmem_limit_bytes():
    """Scoped-VMEM budget: chip capacity minus headroom, capped at 100 MiB.

    v5e/v6e have 128 MiB VMEM (16 / 32 MiB default scoped limit) -> ~100 MiB;
    v7x has 64 MiB -> ~48 MiB."""
    try:
        cap = pltpu.get_tpu_info().vmem_capacity_bytes
    except Exception:  # pragma: no cover - e.g. interpret mode
        cap = 64 * 1024 * 1024
    return int(min(cap - 16 * 1024 * 1024, 100 * 1024 * 1024))


def _pick_row_tile(n, max_tile, align=16):
    """Row tile (second-to-last dim): multiple of `align`; when the whole
    dimension would fit in one tile, split it so the 'parallel' grid axis has
    >= 2 steps and both v7x TensorCores get work."""
    if n > max_tile:
        return max_tile
    n_pad = _round_up(n, align)
    if n_pad >= 2 * align:
        return _round_up(-(-n_pad // 2), align)
    return n_pad


# --------------------- kernel 1: fused message computation -------------------
def _msg_kernel(uhg_ref, ihg_ref, uew_ref, iemb_ref, gemb_ref,
                w_ig_ref, b_ref, msg_ref, msg_acc, im_acc):
    k = pl.program_id(1)

    @pl.when(k == 0)
    def _():
        msg_acc[...] = jnp.zeros_like(msg_acc)
        im_acc[...] = jnp.zeros_like(im_acc)

    # user term of msg: user_hyper_graph @ (user_emb @ W_user)  (W_user folded
    # into the embedding in the wrapper) -- accumulated over the U tiles.
    msg_acc[...] += jnp.dot(uhg_ref[...], uew_ref[...],
                            preferred_element_type=jnp.float32)
    # item_msg partial: item_hyper_graph @ item_emb -- accumulated over I.
    im_acc[...] += jnp.dot(ihg_ref[...], iemb_ref[...],
                           preferred_element_type=jnp.float32)

    @pl.when(k == pl.num_programs(1) - 1)
    def _():
        im = im_acc[...]
        ige = im * gemb_ref[...].astype(jnp.float32)
        # cat([item_msg, ige], -1) @ [[W_item], [W_ige]] : one K = 2*Dp matmul
        # (better MXU depth utilization than two K = Dp dots).
        stacked = jnp.concatenate([im, ige], axis=-1)
        msg = (msg_acc[...]
               + jnp.dot(stacked, w_ig_ref[...],
                         preferred_element_type=jnp.float32)
               + b_ref[...])
        msg_ref[...] = msg.astype(msg_ref.dtype)


# --------------------- kernel 2: norm_emb = full_hyper @ msg -----------------
def _norm_kernel_resident(fh_ref, msg_ref, out_ref):
    # msg is fully resident in VMEM: single pass per N tile, no scratch.
    out_ref[...] = jnp.dot(fh_ref[...], msg_ref[...],
                           preferred_element_type=jnp.float32
                           ).astype(out_ref.dtype)


def _norm_kernel_ktiled(fh_ref, msg_ref, out_ref, acc_ref):
    # Fallback for very large G: K-tiled accumulator matmul.
    @pl.when(pl.program_id(1) == 0)
    def _():
        acc_ref[...] = jnp.zeros_like(acc_ref)

    acc_ref[...] += jnp.dot(fh_ref[...], msg_ref[...],
                            preferred_element_type=jnp.float32)

    @pl.when(pl.program_id(1) == pl.num_programs(1) - 1)
    def _():
        out_ref[...] = acc_ref[...].astype(out_ref.dtype)


def hypergraph_basic_convolution(user_emb, item_emb, group_emb,
                                 user_hg, item_hg, full_hyper,
                                 w_agg, b_agg,
                                 *, max_tile_g=256, max_tile_n=512,
                                 max_tile_k=512,
                                 msg_resident_limit=4 * 1024 * 1024):
    """Forward pass.  Returns (norm_emb [N, D], msg [G, D])."""
    U, D = user_emb.shape
    I = item_emb.shape[0]
    G = group_emb.shape[0]
    N = full_hyper.shape[0]
    out_dtype = user_emb.dtype
    vmem_limit = _vmem_limit_bytes()

    # ---- split aggregation weight ([D, 3D] = (out, in)); fold W_user -------
    w_t = w_agg.T.astype(jnp.float32)                    # [3D, D] (in, out)
    wu, wi, wg = w_t[:D], w_t[D:2 * D], w_t[2 * D:]
    user_emb_wu = user_emb.astype(jnp.float32) @ wu      # [U, D]

    # ---- lane-dense D (pad to a multiple of 128) ----------------------------
    Dp = _round_up(D, 128)

    # ---- row tiles (hyperedges / output rows) --------------------------------
    tile_g = _pick_row_tile(G, max_tile_g)
    G_pad = _round_up(G, tile_g)
    tile_n = _pick_row_tile(N, max_tile_n)
    N_pad = _round_up(N, tile_n)

    # ---- contraction tiles over users / items --------------------------------
    # Same number of K steps for both contractions, with proportional widths,
    # so per-step VMEM is bounded for any U / I.  Budget (bf16, tile_g=256,
    # tile_k=512, Dp=128): ~2 x (256*512*2)*2 + 2 x (512*128*2)*2 + out/scratch
    # ~= 3 MiB, comfortably inside the v7x 48 MiB budget.
    k_steps = max(-(-U // max_tile_k), -(-I // max_tile_k), 1)
    tile_ku = _round_up(-(-U // k_steps), 128)
    tile_ki = _round_up(-(-I // k_steps), 128)
    U_pad = k_steps * tile_ku
    I_pad = k_steps * tile_ki

    # ---- pad & cast operands -------------------------------------------------
    # Incidence values ({0, 0.5, 1}) are exact in bf16; streamed embedding
    # operands are bf16 as well (halved HBM/VMEM traffic, bf16 MXU), with f32
    # accumulation inside the kernels.
    uhg_p = _pad2d(user_hg, G_pad, U_pad).astype(jnp.bfloat16)
    ihg_p = _pad2d(item_hg, G_pad, I_pad).astype(jnp.bfloat16)
    fh_p = _pad2d(full_hyper, N_pad, G_pad).astype(jnp.bfloat16)
    uew_p = _pad2d(user_emb_wu, U_pad, Dp).astype(jnp.bfloat16)
    iemb_p = _pad2d(item_emb.astype(jnp.float32), I_pad, Dp).astype(jnp.bfloat16)
    gemb_p = _pad2d(group_emb.astype(jnp.float32), G_pad, Dp)
    # Stacked aggregation weight for [item_msg | ige] and padded bias (f32).
    w_ig = jnp.concatenate([_pad2d(wi, Dp, Dp), _pad2d(wg, Dp, Dp)], axis=0)
    b2d = _pad2d(b_agg.reshape(1, D).astype(jnp.float32), 1, Dp)

    # ---- kernel 1: msg [G_pad, Dp] (f32) --------------------------------------
    msg_p = pl.pallas_call(
        _msg_kernel,
        out_shape=jax.ShapeDtypeStruct((G_pad, Dp), jnp.float32),
        grid_spec=pltpu.PrefetchScalarGridSpec(
            num_scalar_prefetch=0,
            grid=(G_pad // tile_g, k_steps),          # reduction axis last
            in_specs=[
                pl.BlockSpec((tile_g, tile_ku), lambda g, k: (g, k)),  # user incidence
                pl.BlockSpec((tile_g, tile_ki), lambda g, k: (g, k)),  # item incidence
                pl.BlockSpec((tile_ku, Dp), lambda g, k: (k, 0)),      # user_emb @ Wu
                pl.BlockSpec((tile_ki, Dp), lambda g, k: (k, 0)),      # item_emb
                pl.BlockSpec((tile_g, Dp), lambda g, k: (g, 0)),       # group_emb rows
                _resident_spec((2 * Dp, Dp)),                          # [W_item; W_ige]
                _resident_spec((1, Dp)),                               # bias
            ],
            out_specs=pl.BlockSpec((tile_g, Dp), lambda g, k: (g, 0)),
            scratch_shapes=[pltpu.VMEM((tile_g, Dp), jnp.float32),     # msg acc
                            pltpu.VMEM((tile_g, Dp), jnp.float32)],    # item_msg acc
        ),
        compiler_params=pltpu.CompilerParams(
            dimension_semantics=("parallel", "arbitrary"),
            vmem_limit_bytes=vmem_limit),
    )(uhg_p, ihg_p, uew_p, iemb_p, gemb_p, w_ig, b2d)

    # ---- kernel 2: norm_emb = full_hyper @ msg --------------------------------
    if G_pad * Dp * 4 <= msg_resident_limit:
        # msg stays resident in VMEM; single pass per N-row tile.
        norm_p = pl.pallas_call(
            _norm_kernel_resident,
            out_shape=jax.ShapeDtypeStruct((N_pad, Dp), jnp.float32),
            grid_spec=pltpu.PrefetchScalarGridSpec(
                num_scalar_prefetch=0,
                grid=(N_pad // tile_n,),
                in_specs=[
                    _spec((tile_n, G_pad), lambda i: (i, 0), buffers=3),  # streamed
                    _resident_spec((G_pad, Dp)),                          # msg resident
                ],
                out_specs=pl.BlockSpec((tile_n, Dp), lambda i: (i, 0)),
            ),
            compiler_params=pltpu.CompilerParams(
                dimension_semantics=("parallel",),
                vmem_limit_bytes=vmem_limit),
        )(fh_p, msg_p)
    else:
        # Very large G: K-tiled accumulator matmul over the G axis.
        norm_p = pl.pallas_call(
            _norm_kernel_ktiled,
            out_shape=jax.ShapeDtypeStruct((N_pad, Dp), jnp.float32),
            grid_spec=pltpu.PrefetchScalarGridSpec(
                num_scalar_prefetch=0,
                grid=(N_pad // tile_n, G_pad // tile_g),
                in_specs=[
                    pl.BlockSpec((tile_n, tile_g), lambda i, k: (i, k)),
                    pl.BlockSpec((tile_g, Dp), lambda i, k: (k, 0)),
                ],
                out_specs=pl.BlockSpec((tile_n, Dp), lambda i, k: (i, 0)),
                scratch_shapes=[pltpu.VMEM((tile_n, Dp), jnp.float32)],
            ),
            compiler_params=pltpu.CompilerParams(
                dimension_semantics=("parallel", "arbitrary"),
                vmem_limit_bytes=vmem_limit),
        )(fh_p, msg_p)

    norm_emb = norm_p[:N, :D].astype(out_dtype)
    msg = msg_p[:G, :D].astype(out_dtype)
    return norm_emb, msg


if __name__ == "__main__":
    key = jax.random.PRNGKey(0)
    ks = jax.random.split(key, 8)

    D = 32                      # input_dim
    U, I, G = 40, 48, 24        # users / items / hyperedges (groups)
    N = 56                      # rows of full_hyper

    user_emb = jax.random.normal(ks[0], (U, D), dtype=jnp.float32)
    item_emb = jax.random.normal(ks[1], (I, D), dtype=jnp.float32)
    group_emb = jax.random.normal(ks[2], (G, D), dtype=jnp.float32)

    # Sparse incidence matrices, materialized densely ({0, 0.5, 1} values).
    user_hg = (jax.random.uniform(ks[3], (G, U)) < 0.15).astype(jnp.float32)
    item_hg = (jax.random.uniform(ks[4], (G, I)) < 0.15).astype(jnp.float32)
    full_hyper = (jax.random.uniform(ks[5], (N, G)) < 0.2).astype(jnp.float32) * 0.5

    # aggregation = nn.Linear(3 * D, D): weight [D, 3D] (out, in), bias [D]
    w_agg = jax.random.normal(ks[6], (D, 3 * D), dtype=jnp.float32) * 0.05
    b_agg = jax.random.normal(ks[7], (D,), dtype=jnp.float32) * 0.05

    norm_emb, msg = hypergraph_basic_convolution(
        user_emb, item_emb, group_emb, user_hg, item_hg, full_hyper,
        w_agg, b_agg)
    norm_emb, msg = jax.block_until_ready((norm_emb, msg))

    # Pure-f32 JAX reference (mirrors the PyTorch forward exactly).  The
    # kernel streams embeddings in bf16 (f32 accumulation), so tolerances are
    # set for bf16-level rounding.
    um = user_hg @ user_emb
    im = item_hg @ item_emb
    ige = im * group_emb
    ref_msg = jnp.concatenate([um, im, ige], axis=1) @ w_agg.T + b_agg
    ref_norm = full_hyper @ ref_msg

    assert msg.shape == (G, D) and norm_emb.shape == (N, D)
    assert jnp.allclose(msg, ref_msg, atol=5e-2, rtol=5e-2), "msg mismatch"
    assert jnp.allclose(norm_emb, ref_norm, atol=5e-2, rtol=5e-2), "norm_emb mismatch"

    print("KERNEL_OK")
</pallas_src>

<mosaic_0001>
module attributes {stable_mosaic.version = 11 : i64} {
  func.func @_msg_kernel(%arg0: i32, %arg1: i32, %arg2: memref<16x128xbf16, #tpu.memory_space<vmem>>, %arg3: memref<16x128xbf16, #tpu.memory_space<vmem>>, %arg4: memref<128x128xbf16, #tpu.memory_space<vmem>>, %arg5: memref<128x128xbf16, #tpu.memory_space<vmem>>, %arg6: memref<16x128xf32, #tpu.memory_space<vmem>>, %arg7: memref<256x128xf32, #tpu.memory_space<vmem>>, %arg8: memref<1x128xf32, #tpu.memory_space<vmem>>, %arg9: memref<16x128xf32, #tpu.memory_space<vmem>>, %arg10: memref<16x128xf32, #tpu.memory_space<vmem>>, %arg11: memref<16x128xf32, #tpu.memory_space<vmem>>) attributes {dimension_semantics = [#tpu.dimension_semantics<parallel>, #tpu.dimension_semantics<arbitrary>], iteration_bounds = array<i64: 2, 1>, scalar_prefetch = 0 : i64, scratch_operands = 2 : i64, tpu.core_type = #tpu.core_type<tc>, window_params = [{transform_indices = @transform_0, window_bounds = array<i64: 16, 128>}, {transform_indices = @transform_1, window_bounds = array<i64: 16, 128>}, {transform_indices = @transform_2, window_bounds = array<i64: 128, 128>}, {transform_indices = @transform_3, window_bounds = array<i64: 128, 128>}, {transform_indices = @transform_4, window_bounds = array<i64: 16, 128>}, {pipeline_mode = #tpu.pipeline_mode<synchronous>, transform_indices = @transform_5, window_bounds = array<i64: 256, 128>}, {pipeline_mode = #tpu.pipeline_mode<synchronous>, transform_indices = @transform_6, window_bounds = array<i64: 1, 128>}, {transform_indices = @transform_7, window_bounds = array<i64: 16, 128>}]} {
    %c0_i32 = arith.constant 0 : i32
    %0 = arith.cmpi eq, %arg1, %c0_i32 : i32
    %1 = arith.extui %0 : i1 to i32
    %c0_i32_0 = arith.constant 0 : i32
    %2 = arith.cmpi ne, %1, %c0_i32_0 : i32
    scf.if %2 {
      %cst_19 = arith.constant 0.000000e+00 : f32
      %18 = vector.broadcast %cst_19 : f32 to vector<16x128xf32>
      %c0_20 = arith.constant 0 : index
      %c0_21 = arith.constant 0 : index
      %19 = vector.load %arg10[%c0_20, %c0_21] : memref<16x128xf32, #tpu.memory_space<vmem>>, vector<16x128xf32>
      tpu.vector_store %arg10[%c0_20, %c0_21], %18 {strides = array<i32>} : memref<16x128xf32, #tpu.memory_space<vmem>>, vector<16x128xf32>,
      %cst_22 = arith.constant 0.000000e+00 : f32
      %20 = vector.broadcast %cst_22 : f32 to vector<16x128xf32>
      %c0_23 = arith.constant 0 : index
      %c0_24 = arith.constant 0 : index
      %21 = vector.load %arg11[%c0_23, %c0_24] : memref<16x128xf32, #tpu.memory_space<vmem>>, vector<16x128xf32>
      tpu.vector_store %arg11[%c0_23, %c0_24], %20 {strides = array<i32>} : memref<16x128xf32, #tpu.memory_space<vmem>>, vector<16x128xf32>,
    } else {
    }
    %c0 = arith.constant 0 : index
    %c0_1 = arith.constant 0 : index
    %3 = vector.load %arg10[%c0, %c0_1] : memref<16x128xf32, #tpu.memory_space<vmem>>, vector<16x128xf32>
    %c0_2 = arith.constant 0 : index
    %c0_3 = arith.constant 0 : index
    %4 = vector.load %arg2[%c0_2, %c0_3] : memref<16x128xbf16, #tpu.memory_space<vmem>>, vector<16x128xbf16>
    %c0_4 = arith.constant 0 : index
    %c0_5 = arith.constant 0 : index
    %5 = vector.load %arg4[%c0_4, %c0_5] : memref<128x128xbf16, #tpu.memory_space<vmem>>, vector<128x128xbf16>
    %cst = arith.constant dense<0.000000e+00> : vector<16x128xf32>
    %6 = tpu.matmul %4, %5, %cst {dimension_numbers = #tpu.dot_dimension_numbers<[1], [0], [0], [1], [0, 0, 1, 1], [], []>} : vector<16x128xbf16>, vector<128x128xbf16>, vector<16x128xf32> -> vector<16x128xf32>
    %7 = arith.addf %3, %6 : vector<16x128xf32>
    %c0_6 = arith.constant 0 : index
    %c0_7 = arith.constant 0 : index
    %8 = vector.load %arg10[%c0_6, %c0_7] : memref<16x128xf32, #tpu.memory_space<vmem>>, vector<16x128xf32>
    tpu.vector_store %arg10[%c0_6, %c0_7], %7 {strides = array<i32>} : memref<16x128xf32, #tpu.memory_space<vmem>>, vector<16x128xf32>,
    %c0_8 = arith.constant 0 : index
    %c0_9 = arith.constant 0 : index
    %9 = vector.load %arg11[%c0_8, %c0_9] : memref<16x128xf32, #tpu.memory_space<vmem>>, vector<16x128xf32>
    %c0_10 = arith.constant 0 : index
    %c0_11 = arith.constant 0 : index
    %10 = vector.load %arg3[%c0_10, %c0_11] : memref<16x128xbf16, #tpu.memory_space<vmem>>, vector<16x128xbf16>
    %c0_12 = arith.constant 0 : index
    %c0_13 = arith.constant 0 : index
    %11 = vector.load %arg5[%c0_12, %c0_13] : memref<128x128xbf16, #tpu.memory_space<vmem>>, vector<128x128xbf16>
    %cst_14 = arith.constant dense<0.000000e+00> : vector<16x128xf32>
    %12 = tpu.matmul %10, %11, %cst_14 {dimension_numbers = #tpu.dot_dimension_numbers<[1], [0], [0], [1], [0, 0, 1, 1], [], []>} : vector<16x128xbf16>, vector<128x128xbf16>, vector<16x128xf32> -> vector<16x128xf32>
    %13 = arith.addf %9, %12 : vector<16x128xf32>
    %c0_15 = arith.constant 0 : index
    %c0_16 = arith.constant 0 : index
    %14 = vector.load %arg11[%c0_15, %c0_16] : memref<16x128xf32, #tpu.memory_space<vmem>>, vector<16x128xf32>
    tpu.vector_store %arg11[%c0_15, %c0_16], %13 {strides = array<i32>} : memref<16x128xf32, #tpu.memory_space<vmem>>, vector<16x128xf32>,
    %c0_i32_17 = arith.constant 0 : i32
    %15 = arith.cmpi eq, %arg1, %c0_i32_17 : i32
    %16 = arith.extui %15 : i1 to i32
    %c0_i32_18 = arith.constant 0 : i32
    %17 = arith.cmpi ne, %16, %c0_i32_18 : i32
    scf.if %17 {
      %c0_19 = arith.constant 0 : index
      %c0_20 = arith.constant 0 : index
      %18 = vector.load %arg11[%c0_19, %c0_20] : memref<16x128xf32, #tpu.memory_space<vmem>>, vector<16x128xf32>
      %c0_21 = arith.constant 0 : index
      %c0_22 = arith.constant 0 : index
      %19 = vector.load %arg6[%c0_21, %c0_22] : memref<16x128xf32, #tpu.memory_space<vmem>>, vector<16x128xf32>
      %20 = arith.mulf %18, %19 : vector<16x128xf32>
      %21 = tpu.concatenate %18, %20 in 1 : vector<16x128xf32>, vector<16x128xf32> -> vector<16x256xf32>
      %c0_23 = arith.constant 0 : index
      %c0_24 = arith.constant 0 : index
      %22 = vector.load %arg10[%c0_23, %c0_24] : memref<16x128xf32, #tpu.memory_space<vmem>>, vector<16x128xf32>
      %c0_25 = arith.constant 0 : index
      %c0_26 = arith.constant 0 : index
      %23 = vector.load %arg7[%c0_25, %c0_26] : memref<256x128xf32, #tpu.memory_space<vmem>>, vector<256x128xf32>
      %cst_27 = arith.constant dense<0.000000e+00> : vector<16x128xf32>
      %24 = tpu.matmul %21, %23, %cst_27 {dimension_numbers = #tpu.dot_dimension_numbers<[1], [0], [0], [1], [0, 0, 1, 1], [], []>} : vector<16x256xf32>, vector<256x128xf32>, vector<16x128xf32> -> vector<16x128xf32>
      %25 = arith.addf %22, %24 : vector<16x128xf32>
      %c0_28 = arith.constant 0 : index
      %c0_29 = arith.constant 0 : index
      %26 = vector.load %arg8[%c0_28, %c0_29] : memref<1x128xf32, #tpu.memory_space<vmem>>, vector<1x128xf32>
      %27 = vector.broadcast %26 : vector<1x128xf32> to vector<16x128xf32>
      %28 = arith.addf %25, %27 : vector<16x128xf32>
      %c0_30 = arith.constant 0 : index
      %c0_31 = arith.constant 0 : index
      %29 = vector.load %arg9[%c0_30, %c0_31] : memref<16x128xf32, #tpu.memory_space<vmem>>, vector<16x128xf32>
      tpu.vector_store %arg9[%c0_30, %c0_31], %28 {strides = array<i32>} : memref<16x128xf32, #tpu.memory_space<vmem>>, vector<16x128xf32>,
    } else {
    }
    return
  }
  func.func @transform_0(%arg0: i32, %arg1: i32) -> (i32, i32) {
    %c0_i32 = arith.constant 0 : i32
    return %arg0, %arg1 : i32, i32
  }
  func.func @transform_1(%arg0: i32, %arg1: i32) -> (i32, i32) {
    %c0_i32 = arith.constant 0 : i32
    return %arg0, %arg1 : i32, i32
  }
  func.func @transform_2(%arg0: i32, %arg1: i32) -> (i32, i32) {
    %c0_i32 = arith.constant 0 : i32
    %c0_i32_0 = arith.constant 0 : i32
    return %arg1, %c0_i32 : i32, i32
  }
  func.func @transform_3(%arg0: i32, %arg1: i32) -> (i32, i32) {
    %c0_i32 = arith.constant 0 : i32
    %c0_i32_0 = arith.constant 0 : i32
    return %arg1, %c0_i32 : i32, i32
  }
  func.func @transform_4(%arg0: i32, %arg1: i32) -> (i32, i32) {
    %c0_i32 = arith.constant 0 : i32
    %c0_i32_0 = arith.constant 0 : i32
    return %arg0, %c0_i32 : i32, i32
  }
  func.func @transform_5(%arg0: i32, %arg1: i32) -> (i32, i32) {
    %c0_i32 = arith.constant 0 : i32
    %c0_i32_0 = arith.constant 0 : i32
    %c0_i32_1 = arith.constant 0 : i32
    return %c0_i32, %c0_i32_0 : i32, i32
  }
  func.func @transform_6(%arg0: i32, %arg1: i32) -> (i32, i32) {
    %c0_i32 = arith.constant 0 : i32
    %c0_i32_0 = arith.constant 0 : i32
    %c0_i32_1 = arith.constant 0 : i32
    return %c0_i32, %c0_i32_0 : i32, i32
  }
  func.func @transform_7(%arg0: i32, %arg1: i32) -> (i32, i32) {
    %c0_i32 = arith.constant 0 : i32
    %c0_i32_0 = arith.constant 0 : i32
    return %arg0, %c0_i32 : i32, i32
  }
}

</mosaic_0001>

<llo_original>
// kernel: tpu_custom_call.1
$region0: #{tpu_custom_call.1}
  #allocation0 [shape = 'u32[]', space=smem, size = 0x4, offset = 0x4, fixed_abs, tag = 'smem constant byte address 0x4 - core index']
  #allocation1 [shape = 'u32[144,128]{1,0:T(1,128)}', space=vmem, size = 0x12000, scoped, tag = 'internal scratch']
  #allocation2 [shape = 'f32[16,128]{1,0:T(8,128)}', space=vmem, size = 0x2000, scoped, tag = 'scratch operand']
  #allocation3 [shape = 'f32[16,128]{1,0:T(8,128)}', space=vmem, size = 0x2000, scoped, tag = 'scratch operand']
  %s0 = inlined_call_operand.hbm [shape: bf16[32,128], index: 0, kind: input, shape index: {}]
  %s1 = inlined_call_operand.hbm [shape: bf16[32,128], index: 1, kind: input, shape index: {}]
  %s2 = inlined_call_operand.hbm [shape: bf16[128,128], index: 2, kind: input, shape index: {}]
  %s3 = inlined_call_operand.hbm [shape: bf16[128,128], index: 3, kind: input, shape index: {}]
  %s4 = inlined_call_operand.hbm [shape: f32[32,128], index: 4, kind: input, shape index: {}]
  %s5 = inlined_call_operand.hbm [shape: f32[256,128], index: 5, kind: input, shape index: {}]
  %s6 = inlined_call_operand.vmem [shape: f32[1,128], index: 6, kind: input, shape index: {}]
  %s7 = inlined_call_operand.hbm [shape: f32[32,128], index: 7, kind: output, shape index: {}]
  %s8 = sld [smem:[#allocation0]]
  $region93: #{tpu_custom_call.1} parent=0
    _
  %s10 = ssub.s32 1, %s8
  %s11 = scalar_select 0, %s10, %s8
  $region1: #{tpu_custom_call.1} parent=0
    #allocation4 [shape = 'u8[8192]{0}', space=vmem, size = 0x2000, scoped, tag = 'input window, operand 0']
    #allocation5 [shape = 's32[2]{0}', space=sflag, size = 0x8, scoped, tag = 'scoped memory for tpu_custom_call.1']
    #allocation6 [shape = 's32[2]{0}', space=sflag, size = 0x8, scoped, tag = 'scoped memory for tpu_custom_call.1']
    #allocation7 [shape = 'u8[8192]{0}', space=vmem, size = 0x2000, scoped, tag = 'input window, operand 1']
    #allocation8 [shape = 's32[2]{0}', space=sflag, size = 0x8, scoped, tag = 'scoped memory for tpu_custom_call.1']
    #allocation9 [shape = 'u8[32768]{0}', space=vmem, size = 0x8000, scoped, tag = 'input window, operand 2, single buffered']
    #allocation10 [shape = 'u8[32768]{0}', space=vmem, size = 0x8000, scoped, tag = 'input window, operand 3, single buffered']
    #allocation11 [shape = 's32[1]{0}', space=sflag, size = 0x4, scoped, tag = 'scoped memory for tpu_custom_call.1']
    #allocation12 [shape = 'u8[16384]{0}', space=vmem, size = 0x4000, scoped, tag = 'input window, operand 4']
    #allocation13 [shape = 'u8[131072]{0}', space=vmem, size = 0x20000, scoped, tag = 'input window, operand 5, single buffered']
    #allocation14 [shape = 'u8[16384]{0}', space=vmem, size = 0x4000, scoped, tag = 'output window, operand 0']
    %12 = vsyncpa [#allocation5], 0
    %s13 = scalar_lea.sflag [#allocation5], 1
    %14 = vsyncpa %s13, 0
    %15 = vsyncpa [#allocation8], 0
    %s16 = scalar_lea.sflag [#allocation8], 1
    %17 = vsyncpa %s16, 0
    %18 = vsyncpa [#allocation11], 0
    %19 = vsyncpa [#allocation6], 0
    %s20 = scalar_lea.sflag [#allocation6], 1
    %21 = vsyncpa %s20, 0
    loop: start=0, step=1, limit=4
    $region2: #{tpu_custom_call.1} parent=1 // loop_pre_header
      _
    $region3: #{tpu_custom_call.1} parent=1 // loop_header
      %s23 = sphi 0, %s27
      %p24 = scmp.ge.s32.totalorder %s23, 4
      %s30 = sphi 0, %s42
      %s31 = sphi 0, %s38
      %s32 = sphi 0, %s30
      %s33 = sphi 0, %s31
      %s34 = sphi 0, %s32
      %s35 = sphi 0, %s33
      %s47 = sphi 0, %s49
      %s50 = sphi 0, %s47
      %s51 = sphi 0, %s50
      %s67 = sphi 0, %s51
      %s75 = sphi 0, %s77
      %s78 = sphi 0, %s75
      %s79 = sphi 0, %s78
      %s95 = sphi 0, %s79
      %s101 = sphi 0, %s103
      %s104 = sphi 0, %s101
      %s105 = sphi 0, %s104
      %s121 = sphi 0, %s105
      %s127 = sphi 0, %s129
      %s130 = sphi 0, %s127
      %s131 = sphi 0, %s130
      %s147 = sphi 0, %s131
      %s153 = sphi 0, %s155
      %s156 = sphi 0, %s153
      %s157 = sphi 0, %s156
      %s173 = sphi 0, %s157
      %s177 = sphi 0, %s177
      %s179 = sphi 0, %s177
      %s180 = sphi 0, %s179
      %s194 = sphi 0, %s180
      %s198 = sphi 0, %s198
      %s200 = sphi 0, %s198
      %s201 = sphi 0, %s200
      %s215 = sphi 0, %s201
      %s221 = sphi 0, %s223
      %s224 = sphi 0, %s221
      %s225 = sphi 0, %s224
      %s241 = sphi 0, %s225
    $region4: #{tpu_custom_call.1} parent=1 // loop_header_branch
      %26 = sbr.rel (%p24) target = $region8
    $region5: #{tpu_custom_call.1} parent=1 // loop_body
      %s28 = ssub.s32 %s23, 1
      %s29 = ssub.s32 %s23, 2
      %s36 = sadd.s32 1, %s31
      %p37 = scmp.ge.s32.totalorder %s36, 1
      %s38 = scalar_select %p37, 0, %s36
      %s39 = sadd.s32 1, %s30
      %s40 = scalar_select %p37, %s39, %s30
      %p41 = scmp.ge.s32.totalorder %s40, 2
      %s42 = scalar_select %p41, 0, %s40
      %s43 = ssub.s32 %s30, %s42
      %s44 = ssub.s32 %s31, %s38
      %s45 = sor.u32 %s43, %s44
      %p46 = scmp.eq.s32.totalorder %s45, 0
      %s48 = sadd.s32 %s47, 1
      %s49 = scalar_select %p46, %s47, %s48
      %p52 = pneg %p46
      %p53 = scmp.eq.s32.totalorder %s23, 1
      %p54 = por %p52, %p53
      %p55 = scmp.ne.s32.totalorder %s47, %s50
      %p56 = scmp.eq.s32.totalorder %s23, 0
      %p57 = por %p55, %p56
      %p58 = scmp.ne.s32.totalorder %s47, %s50
      %p59 = scmp.eq.s32.totalorder %s28, 1
      %p60 = por %p58, %p59
      %p61 = scmp.ne.s32.totalorder %s50, %s51
      %p62 = scmp.eq.s32.totalorder %s28, 0
      %p63 = por %p61, %p62
      %p64 = scmp.ne.s32.totalorder %s50, %s51
      %p65 = scmp.eq.s32.totalorder %s29, 1
      %p66 = por %p64, %p65
      %p68 = scmp.ne.s32.totalorder %s51, %s67
      %p69 = scmp.eq.s32.totalorder %s29, 0
      %p70 = por %p68, %p69
      %s71 = ssub.s32 %s30, %s42
      %s72 = ssub.s32 %s31, %s38
      %s73 = sor.u32 %s71, %s72
      %p74 = scmp.eq.s32.totalorder %s73, 0
      %s76 = sadd.s32 %s75, 1
      %s77 = scalar_select %p74, %s75, %s76
      %p80 = pneg %p74
      %p81 = scmp.eq.s32.totalorder %s23, 1
      %p82 = por %p80, %p81
      %p83 = scmp.ne.s32.totalorder %s75, %s78
      %p84 = scmp.eq.s32.totalorder %s23, 0
      %p85 = por %p83, %p84
      %p86 = scmp.ne.s32.totalorder %s75, %s78
      %p87 = scmp.eq.s32.totalorder %s28, 1
      %p88 = por %p86, %p87
      %p89 = scmp.ne.s32.totalorder %s78, %s79
      %p90 = scmp.eq.s32.totalorder %s28, 0
      %p91 = por %p89, %p90
      %p92 = scmp.ne.s32.totalorder %s78, %s79
      %p93 = scmp.eq.s32.totalorder %s29, 1
      %p94 = por %p92, %p93
      %p96 = scmp.ne.s32.totalorder %s79, %s95
      %p97 = scmp.eq.s32.totalorder %s29, 0
      %p98 = por %p96, %p97
      %s99 = ssub.s32 %s31, %s38
      %p100 = scmp.eq.s32.totalorder %s99, 0
      %s102 = sadd.s32 %s101, 1
      %s103 = scalar_select %p100, %s101, %s102
      %p106 = pneg %p100
      %p107 = scmp.eq.s32.totalorder %s23, 1
      %p108 = por %p106, %p107
      %p109 = scmp.ne.s32.totalorder %s101, %s104
      %p110 = scmp.eq.s32.totalorder %s23, 0
      %p111 = por %p109, %p110
      %p112 = scmp.ne.s32.totalorder %s101, %s104
      %p113 = scmp.eq.s32.totalorder %s28, 1
      %p114 = por %p112, %p113
      %p115 = scmp.ne.s32.totalorder %s104, %s105
      %p116 = scmp.eq.s32.totalorder %s28, 0
      %p117 = por %p115, %p116
      %p118 = scmp.ne.s32.totalorder %s104, %s105
      %p119 = scmp.eq.s32.totalorder %s29, 1
      %p120 = por %p118, %p119
      %p122 = scmp.ne.s32.totalorder %s105, %s121
      %p123 = scmp.eq.s32.totalorder %s29, 0
      %p124 = por %p122, %p123
      %s125 = ssub.s32 %s31, %s38
      %p126 = scmp.eq.s32.totalorder %s125, 0
      %s128 = sadd.s32 %s127, 1
      %s129 = scalar_select %p126, %s127, %s128
      %p132 = pneg %p126
      %p133 = scmp.eq.s32.totalorder %s23, 1
      %p134 = por %p132, %p133
      %p135 = scmp.ne.s32.totalorder %s127, %s130
      %p136 = scmp.eq.s32.totalorder %s23, 0
      %p137 = por %p135, %p136
      %p138 = scmp.ne.s32.totalorder %s127, %s130
      %p139 = scmp.eq.s32.totalorder %s28, 1
      %p140 = por %p138, %p139
      %p141 = scmp.ne.s32.totalorder %s130, %s131
      %p142 = scmp.eq.s32.totalorder %s28, 0
      %p143 = por %p141, %p142
      %p144 = scmp.ne.s32.totalorder %s130, %s131
      %p145 = scmp.eq.s32.totalorder %s29, 1
      %p146 = por %p144, %p145
      %p148 = scmp.ne.s32.totalorder %s131, %s147
      %p149 = scmp.eq.s32.totalorder %s29, 0
      %p150 = por %p148, %p149
      %s151 = ssub.s32 %s30, %s42
      %p152 = scmp.eq.s32.totalorder %s151, 0
      %s154 = sadd.s32 %s153, 1
      %s155 = scalar_select %p152, %s153, %s154
      %p158 = pneg %p152
      %p159 = scmp.eq.s32.totalorder %s23, 1
      %p160 = por %p158, %p159
      %p161 = scmp.ne.s32.totalorder %s153, %s156
      %p162 = scmp.eq.s32.totalorder %s23, 0
      %p163 = por %p161, %p162
      %p164 = scmp.ne.s32.totalorder %s153, %s156
      %p165 = scmp.eq.s32.totalorder %s28, 1
      %p166 = por %p164, %p165
      %p167 = scmp.ne.s32.totalorder %s156, %s157
      %p168 = scmp.eq.s32.totalorder %s28, 0
      %p169 = por %p167, %p168
      %p170 = scmp.ne.s32.totalorder %s156, %s157
      %p171 = scmp.eq.s32.totalorder %s29, 1
      %p172 = por %p170, %p171
      %p174 = scmp.ne.s32.totalorder %s157, %s173
      %p175 = scmp.eq.s32.totalorder %s29, 0
      %p176 = por %p174, %p175
      %s178 = sadd.s32 %s177, 1
      %p181 = scmp.eq.s32.totalorder %s23, 1
      %p182 = scmp.ne.s32.totalorder %s177, %s179
      %p183 = scmp.eq.s32.totalorder %s23, 0
      %p184 = por %p182, %p183
      %p185 = scmp.ne.s32.totalorder %s177, %s179
      %p186 = scmp.eq.s32.totalorder %s28, 1
      %p187 = por %p185, %p186
      %p188 = scmp.ne.s32.totalorder %s179, %s180
      %p189 = scmp.eq.s32.totalorder %s28, 0
      %p190 = por %p188, %p189
      %p191 = scmp.ne.s32.totalorder %s179, %s180
      %p192 = scmp.eq.s32.totalorder %s29, 1
      %p193 = por %p191, %p192
      %p195 = scmp.ne.s32.totalorder %s180, %s194
      %p196 = scmp.eq.s32.totalorder %s29, 0
      %p197 = por %p195, %p196
      %s199 = sadd.s32 %s198, 1
      %p202 = scmp.eq.s32.totalorder %s23, 1
      %p203 = scmp.ne.s32.totalorder %s198, %s200
      %p204 = scmp.eq.s32.totalorder %s23, 0
      %p205 = por %p203, %p204
      %p206 = scmp.ne.s32.totalorder %s198, %s200
      %p207 = scmp.eq.s32.totalorder %s28, 1
      %p208 = por %p206, %p207
      %p209 = scmp.ne.s32.totalorder %s200, %s201
      %p210 = scmp.eq.s32.totalorder %s28, 0
      %p211 = por %p209, %p210
      %p212 = scmp.ne.s32.totalorder %s200, %s201
      %p213 = scmp.eq.s32.totalorder %s29, 1
      %p214 = por %p212, %p213
      %p216 = scmp.ne.s32.totalorder %s201, %s215
      %p217 = scmp.eq.s32.totalorder %s29, 0
      %p218 = por %p216, %p217
      %s219 = ssub.s32 %s30, %s42
      %p220 = scmp.eq.s32.totalorder %s219, 0
      %s222 = sadd.s32 %s221, 1
      %s223 = scalar_select %p220, %s221, %s222
      %p226 = pneg %p220
      %p227 = scmp.eq.s32.totalorder %s23, 1
      %p228 = por %p226, %p227
      %p229 = scmp.ne.s32.totalorder %s221, %s224
      %p230 = scmp.eq.s32.totalorder %s23, 0
      %p231 = por %p229, %p230
      %p232 = scmp.ne.s32.totalorder %s221, %s224
      %p233 = scmp.eq.s32.totalorder %s28, 1
      %p234 = por %p232, %p233
      %p235 = scmp.ne.s32.totalorder %s224, %s225
      %p236 = scmp.eq.s32.totalorder %s28, 0
      %p237 = por %p235, %p236
      %p238 = scmp.ne.s32.totalorder %s224, %s225
      %p239 = scmp.eq.s32.totalorder %s29, 1
      %p240 = por %p238, %p239
      %p242 = scmp.ne.s32.totalorder %s225, %s241
      %p243 = scmp.eq.s32.totalorder %s29, 0
      %p244 = por %p242, %p243
      %p245 = scmp.le.s32.totalorder 1, %s23
      %p246 = scmp.lt.s32.totalorder %s23, 3
      %p247 = pnand %p245, %p246
      %p248 = pneg %p247
      // Predicated region
      $region9: #{tpu_custom_call.1} parent=5 // pred_check
        _
      $region10: #{tpu_custom_call.1} parent=5 // pred_check_branch
        %250 = sbr.rel (%p247) target = $region12
      $region11: #{tpu_custom_call.1} parent=5 // pred_region
        %s251 = ssub.s32 %s23, 1
        // Predicated region
        $region13: #{tpu_custom_call.1} parent=11 // pred_check
          %p252 = pneg %p117
        $region14: #{tpu_custom_call.1} parent=11 // pred_check_branch
          %254 = sbr.rel (%p252) target = $region16
        $region15: #{tpu_custom_call.1} parent=11 // pred_region
          %s255 = smul.u32 16, %s33
          %s257 = ssub.s32 1024, 1024
          %258 = vsyncadd [#allocation8], %s257
          %s259 = smul.addr %s255, 64
          %s260 = scalar_lea.hbm %s2, %s259
          %s261 = sshll.u32 [#allocation9], 4
          %s262 = int_to_ptr.vmem [resolvable:$true] %s261
          %267 = dma.hbm_to_vmem [thread:$0]  %s260, 1024, %s262, [#allocation8], 64, 64, 4
        $region16: #{tpu_custom_call.1} parent=11 // pred_fallthru
          _
        // Predicated region
        $region17: #{tpu_custom_call.1} parent=11 // pred_check
          %p268 = pneg %p143
        $region18: #{tpu_custom_call.1} parent=11 // pred_check_branch
          %270 = sbr.rel (%p268) target = $region20
        $region19: #{tpu_custom_call.1} parent=11 // pred_region
          %s271 = smul.u32 16, %s33
          %s273 = ssub.s32 1024, 1024
          %274 = vsyncadd [#allocation11], %s273
          %s275 = smul.addr %s271, 64
          %s276 = scalar_lea.hbm %s3, %s275
          %s277 = sshll.u32 [#allocation10], 4
          %s278 = int_to_ptr.vmem [resolvable:$true] %s277
          %283 = dma.hbm_to_vmem [thread:$0]  %s276, 1024, %s278, [#allocation11], 64, 64, 4
        $region20: #{tpu_custom_call.1} parent=11 // pred_fallthru
          _
        // Predicated region
        $region21: #{tpu_custom_call.1} parent=11 // pred_check
          %p284 = pneg %p190
        $region22: #{tpu_custom_call.1} parent=11 // pred_check_branch
          %286 = sbr.rel (%p284) target = $region24
        $region23: #{tpu_custom_call.1} parent=11 // pred_region
          %s288 = ssub.s32 4096, 4096
          %289 = vsyncadd [#allocation8], %s288
          %s290 = sshll.u32 [#allocation13], 4
          %s291 = int_to_ptr.vmem [resolvable:$true] %s290
          %296 = dma.hbm_to_vmem [thread:$0]  %s5, 4096, %s291, [#allocation8], 128, 128, 8
        $region24: #{tpu_custom_call.1} parent=11 // pred_fallthru
          _
        // Predicated region
        $region25: #{tpu_custom_call.1} parent=11 // pred_check
          %p297 = pneg %p211
        $region26: #{tpu_custom_call.1} parent=11 // pred_check_branch
          %299 = sbr.rel (%p297) target = $region28
        $region27: #{tpu_custom_call.1} parent=11 // pred_region
          _
        $region28: #{tpu_custom_call.1} parent=11 // pred_fallthru
          _
      $region12: #{tpu_custom_call.1} parent=5 // pred_fallthru
        _
      %p300 = scmp.lt.s32.totalorder %s23, 2
      // Predicated region
      $region29: #{tpu_custom_call.1} parent=5 // pred_check
        %p301 = pneg %p300
      $region30: #{tpu_custom_call.1} parent=5 // pred_check_branch
        %303 = sbr.rel (%p301) target = $region32
      $region31: #{tpu_custom_call.1} parent=5 // pred_region
        // Predicated region
        $region33: #{tpu_custom_call.1} parent=31 // pred_check
          %p304 = pneg %p57
        $region34: #{tpu_custom_call.1} parent=31 // pred_check_branch
          %306 = sbr.rel (%p304) target = $region36
        $region35: #{tpu_custom_call.1} parent=31 // pred_region
          %s307 = sand.u32 %s23, 1
          %s308 = scalar_lea.sflag [#allocation5], %s307
          %s309 = sand.u32 %s47, 1
          %s310 = smul.addr %s309, 8
          %s311 = scalar_lea.vmem [#allocation4], %s310
          %s312 = smul.u32 2, %s30
          %s314 = ssub.s32 128, 128
          %315 = vsyncadd %s308, %s314
          %s316 = sadd.s32 %s31, %s312
          %s317 = smul.addr %s316, 64
          %s318 = scalar_lea.hbm %s0, %s317
          %s319 = sshll.u32 %s311, 4
          %s320 = int_to_ptr.vmem [resolvable:$true] %s319
          %325 = dma.hbm_to_vmem [thread:$0]  %s318, 128, %s320, %s308, 64, 64, 4
        $region36: #{tpu_custom_call.1} parent=31 // pred_fallthru
          _
        // Predicated region
        $region37: #{tpu_custom_call.1} parent=31 // pred_check
          %p326 = pneg %p85
        $region38: #{tpu_custom_call.1} parent=31 // pred_check_branch
          %328 = sbr.rel (%p326) target = $region40
        $region39: #{tpu_custom_call.1} parent=31 // pred_region
          %s329 = sand.u32 %s23, 1
          %s330 = scalar_lea.sflag [#allocation8], %s329
          %s331 = sand.u32 %s75, 1
          %s332 = smul.addr %s331, 8
          %s333 = scalar_lea.vmem [#allocation7], %s332
          %s334 = smul.u32 2, %s30
          %s336 = ssub.s32 128, 128
          %337 = vsyncadd %s330, %s336
          %s338 = sadd.s32 %s31, %s334
          %s339 = smul.addr %s338, 64
          %s340 = scalar_lea.hbm %s1, %s339
          %s341 = sshll.u32 %s333, 4
          %s342 = int_to_ptr.vmem [resolvable:$true] %s341
          %347 = dma.hbm_to_vmem [thread:$0]  %s340, 128, %s342, %s330, 64, 64, 4
        $region40: #{tpu_custom_call.1} parent=31 // pred_fallthru
          _
        // Predicated region
        $region41: #{tpu_custom_call.1} parent=31 // pred_check
          %p348 = pneg %p163
        $region42: #{tpu_custom_call.1} parent=31 // pred_check_branch
          %350 = sbr.rel (%p348) target = $region44
        $region43: #{tpu_custom_call.1} parent=31 // pred_region
          %s351 = sand.u32 %s23, 1
          %s352 = scalar_lea.sflag [#allocation5], %s351
          %s353 = sand.u32 %s153, 1
          %s354 = smul.addr %s353, 16
          %s355 = scalar_lea.vmem [#allocation12], %s354
          %s356 = smul.u32 2, %s30
          %s358 = ssub.s32 256, 256
          %359 = vsyncadd %s352, %s358
          %s360 = smul.addr %s356, 128
          %s361 = scalar_lea.hbm %s4, %s360
          %s362 = sshll.u32 %s355, 4
          %s363 = int_to_ptr.vmem [resolvable:$true] %s362
          %368 = dma.hbm_to_vmem [thread:$0]  %s361, 256, %s363, %s352, 128, 128, 8
        $region44: #{tpu_custom_call.1} parent=31 // pred_fallthru
          _
      $region32: #{tpu_custom_call.1} parent=5 // pred_fallthru
        _
      %p369 = scmp.le.s32.totalorder 1, %s23
      %p370 = scmp.lt.s32.totalorder %s23, 3
      %p371 = pnand %p369, %p370
      %p372 = pneg %p371
      // Predicated region
      $region45: #{tpu_custom_call.1} parent=5 // pred_check
        _
      $region46: #{tpu_custom_call.1} parent=5 // pred_check_branch
        %374 = sbr.rel (%p371) target = $region48
      $region47: #{tpu_custom_call.1} parent=5 // pred_region
        %s375 = ssub.s32 %s23, 1
        %s376 = sand.u32 %s28, 1
        %s377 = scalar_lea.sflag [#allocation5], %s376
        %s378 = sand.u32 %s50, 1
        %s379 = smul.addr %s378, 8
        %s380 = scalar_lea.vmem [#allocation4], %s379
        // Predicated region
        $region49: #{tpu_custom_call.1} parent=47 // pred_check
          %p381 = pneg %p63
        $region50: #{tpu_custom_call.1} parent=47 // pred_check_branch
          %383 = sbr.rel (%p381) target = $region52
        $region51: #{tpu_custom_call.1} parent=47 // pred_region
          %384 = dma.done %s377, 128
        $region52: #{tpu_custom_call.1} parent=47 // pred_fallthru
          _
        %s385 = sand.u32 %s28, 1
        %s386 = scalar_lea.sflag [#allocation8], %s385
        %s387 = sand.u32 %s78, 1
        %s388 = smul.addr %s387, 8
        %s389 = scalar_lea.vmem [#allocation7], %s388
        // Predicated region
        $region53: #{tpu_custom_call.1} parent=47 // pred_check
          %p390 = pneg %p91
        $region54: #{tpu_custom_call.1} parent=47 // pred_check_branch
          %392 = sbr.rel (%p390) target = $region56
        $region55: #{tpu_custom_call.1} parent=47 // pred_region
          %393 = dma.done %s386, 128
        $region56: #{tpu_custom_call.1} parent=47 // pred_fallthru
          _
        // Predicated region
        $region57: #{tpu_custom_call.1} parent=47 // pred_check
          %p394 = pneg %p117
        $region58: #{tpu_custom_call.1} parent=47 // pred_check_branch
          %396 = sbr.rel (%p394) target = $region60
        $region59: #{tpu_custom_call.1} parent=47 // pred_region
          %397 = dma.done [#allocation8], 1024
        $region60: #{tpu_custom_call.1} parent=47 // pred_fallthru
          _
        // Predicated region
        $region61: #{tpu_custom_call.1} parent=47 // pred_check
          %p398 = pneg %p143
        $region62: #{tpu_custom_call.1} parent=47 // pred_check_branch
          %400 = sbr.rel (%p398) target = $region64
        $region63: #{tpu_custom_call.1} parent=47 // pred_region
          %401 = dma.done [#allocation11], 1024
        $region64: #{tpu_custom_call.1} parent=47 // pred_fallthru
          _
        %s402 = sand.u32 %s28, 1
        %s403 = scalar_lea.sflag [#allocation5], %s402
        %s404 = sand.u32 %s156, 1
        %s405 = smul.addr %s404, 16
        %s406 = scalar_lea.vmem [#allocation12], %s405
        // Predicated region
        $region65: #{tpu_custom_call.1} parent=47 // pred_check
          %p407 = pneg %p169
        $region66: #{tpu_custom_call.1} parent=47 // pred_check_branch
          %409 = sbr.rel (%p407) target = $region68
        $region67: #{tpu_custom_call.1} parent=47 // pred_region
          %410 = dma.done %s403, 256
        $region68: #{tpu_custom_call.1} parent=47 // pred_fallthru
          _
        // Predicated region
        $region69: #{tpu_custom_call.1} parent=47 // pred_check
          %p411 = pneg %p190
        $region70: #{tpu_custom_call.1} parent=47 // pred_check_branch
          %413 = sbr.rel (%p411) target = $region72
        $region71: #{tpu_custom_call.1} parent=47 // pred_region
          %414 = dma.done [#allocation8], 4096
        $region72: #{tpu_custom_call.1} parent=47 // pred_fallthru
          _
        %s415 = sand.u32 %s28, 1
        %s416 = scalar_lea.sflag [#allocation5], %s415
        %s417 = sand.u32 %s50, 1
        %s418 = smul.addr %s417, 8
        %s419 = scalar_lea.vmem [#allocation4], %s418
        %p420 = pneg %p63
        %p421 = pneg %p60
        %s422 = sand.u32 %s28, 1
        %s423 = scalar_lea.sflag [#allocation8], %s422
        %s424 = sand.u32 %s78, 1
        %s425 = smul.addr %s424, 8
        %s426 = scalar_lea.vmem [#allocation7], %s425
        %p427 = pneg %p91
        %p428 = pneg %p88
        %p429 = pneg %p117
        %p430 = pneg %p114
        %p431 = pneg %p143
        %p432 = pneg %p140
        %s433 = sand.u32 %s28, 1
        %s434 = scalar_lea.sflag [#allocation5], %s433
        %s435 = sand.u32 %s156, 1
        %s436 = smul.addr %s435, 16
        %s437 = scalar_lea.vmem [#allocation12], %s436
        %p438 = pneg %p169
        %p439 = pneg %p166
        %p440 = pneg %p190
        %p441 = pneg %p187
        %p442 = pneg %p211
        %p443 = pneg %p208
        %p444 = pneg %p237
        %p445 = pneg %p234
        %s446 = sand.u32 %s224, 1
        %s447 = scalar_lea.sflag [#allocation6], %s446
        %s448 = sand.u32 %s224, 1
        %s449 = smul.addr %s448, 16
        %s450 = scalar_lea.vmem [#allocation14], %s449
        %s451 = smul.u32 2, %s32
        %s452 = smul.u32 2, %s32
        %s453 = smul.u32 16, %s33
        %s454 = smul.u32 16, %s33
        %s455 = smul.u32 2, %s32
        %s456 = smul.u32 2, %s32
        %p458 = scmp.eq.s32.totalorder %s33, 0
        // Predicated region
        $region73: #{tpu_custom_call.1} parent=47 // pred_check
          %p459 = pneg %p458
        $region74: #{tpu_custom_call.1} parent=47 // pred_check_branch
          %461 = sbr.rel (%p459) target = $region76
        $region75: #{tpu_custom_call.1} parent=47 // pred_region
          %462 = vst [vmem:[#allocation2] sm:$0xff] 0.0
          %463 = vst [vmem:[#allocation2 + $0x8] sm:$0xff] 0.0
          %464 = vst [vmem:[#allocation3] sm:$0xff] 0.0
          %465 = vst [vmem:[#allocation3 + $0x8] sm:$0xff] 0.0
        $region76: #{tpu_custom_call.1} parent=47 // pred_fallthru
          _
        %v466 = vld [vmem:[#allocation2] sm:$0xff]
        %v467 = vld [vmem:[#allocation2 + $0x8] sm:$0xff]
        %v468 = vld [vmem:[%s380] sm:$0xf]
        %v469 = vld [vmem:[%s380 + $0x4] sm:$0xf]
        %v470 = vld [vmem:[#allocation9] sm:$0xf]
        %v471 = vld [vmem:[#allocation9 + $0x4] sm:$0xf]
        %v472 = vld [vmem:[#allocation9 + $0x8] sm:$0xf]
        %v473 = vld [vmem:[#allocation9 + $0xc] sm:$0xf]
        %v474 = vld [vmem:[#allocation9 + $0x10] sm:$0xf]
        %v475 = vld [vmem:[#allocation9 + $0x14] sm:$0xf]
        %v476 = vld [vmem:[#allocation9 + $0x18] sm:$0xf]
        %v477 = vld [vmem:[#allocation9 + $0x1c] sm:$0xf]
        %v478 = vld [vmem:[#allocation9 + $0x20] sm:$0xf]
        %v479 = vld [vmem:[#allocation9 + $0x24] sm:$0xf]
        %v480 = vld [vmem:[#allocation9 + $0x28] sm:$0xf]
        %v481 = vld [vmem:[#allocation9 + $0x2c] sm:$0xf]
        %v482 = vld [vmem:[#allocation9 + $0x30] sm:$0xf]
        %v483 = vld [vmem:[#allocation9 + $0x34] sm:$0xf]
        %v484 = vld [vmem:[#allocation9 + $0x38] sm:$0xf]
        %v485 = vld [vmem:[#allocation9 + $0x3c] sm:$0xf]
        %v488 = vunpack.c.l.b16 %v468
        %v489 = vunpack.c.l.b16 %v469
        %v490 = vpack.c.b16 %v489, %v488
        %v508 = vunpack.c.l.b16 %v470
        %v509 = vunpack.c.l.b16 %v471
        %v510 = vunpack.c.l.b16 %v472
        %v511 = vunpack.c.l.b16 %v473
        %v512 = vunpack.c.l.b16 %v474
        %v513 = vunpack.c.l.b16 %v475
        %v514 = vunpack.c.l.b16 %v476
        %v515 = vunpack.c.l.b16 %v477
        %v516 = vunpack.c.l.b16 %v478
        %v517 = vunpack.c.l.b16 %v479
        %v518 = vunpack.c.l.b16 %v480
        %v519 = vunpack.c.l.b16 %v481
        %v520 = vunpack.c.l.b16 %v482
        %v521 = vunpack.c.l.b16 %v483
        %v522 = vunpack.c.l.b16 %v484
        %v523 = vunpack.c.l.b16 %v485
        %v524 = vpack.c.b16 %v509, %v508
        %v525 = vpack.c.b16 %v511, %v510
        %v526 = vpack.c.b16 %v513, %v512
        %v527 = vpack.c.b16 %v515, %v514
        %v528 = vpack.c.b16 %v517, %v516
        %v529 = vpack.c.b16 %v519, %v518
        %v530 = vpack.c.b16 %v521, %v520
        %v531 = vpack.c.b16 %v523, %v522
        %540 = vmatprep.subr.bf16.mxu0 0
        %541 = vmatpush1.bf16.msra.mxu0 %v531
        %542 = vmatprep.subr.bf16.mxu0 0
        %543 = vmatpush1.bf16.msra.mxu0 %v530
        %544 = vmatprep.subr.bf16.mxu0 0
        %545 = vmatpush1.bf16.msra.mxu0 %v529
        %546 = vmatprep.subr.bf16.mxu0 0
        %547 = vmatpush1.bf16.msra.mxu0 %v528
        %548 = vmatprep.subr.bf16.mxu0 0
        %549 = vmatpush1.bf16.msra.mxu0 %v527
        %550 = vmatprep.subr.bf16.mxu0 0
        %551 = vmatpush1.bf16.msra.mxu0 %v526
        %552 = vmatprep.subr.bf16.mxu0 0
        %553 = vmatpush1.bf16.msra.mxu0 %v525
        %554 = vmatprep.subr.bf16.mxu0 0
        %555 = vmatpush1.bf16.msra.mxu0 %v524
        %556 = vmatprep.subr.bf16.mxu0 0
        %557 = vmatpush2.bf16.msra.mxu0 0
        %558 = vmatprep.subr.bf16.mxu0 0
        %559 = vmatpush2.bf16.msra.mxu0 0
        %560 = vmatprep.subr.bf16.mxu0 0
        %561 = vmatpush2.bf16.msra.mxu0 0
        %562 = vmatprep.subr.bf16.mxu0 0
        %563 = vmatpush2.bf16.msra.mxu0 0
        %564 = vmatprep.subr.bf16.mxu0 0
        %565 = vmatpush2.bf16.msra.mxu0 0
        %566 = vmatprep.subr.bf16.mxu0 0
        %567 = vmatpush2.bf16.msra.mxu0 0
        %568 = vmatprep.subr.bf16.mxu0 0
        %569 = vmatpush2.bf16.msra.mxu0 0
        %570 = vmatprep.subr.bf16.mxu0 0
        %571 = vmatpush2.bf16.msra.mxu0 0
        %572 = vmatprep.mubr.bf16.mxu0 0
        %573 = vmatmul.mubr.bf16.gmra.mxu0 %v490
        %v574 = vpop.f32.mrf.mxu0
        %v575 = vadd.f32 0.0, %v574
        %v576 = vpop.f32.mrf.mxu0
        %v577 = vpop.f32.mrf.mxu0
        %v578 = vadd.f32 0.0, %v577
        %v579 = vpop.f32.mrf.mxu0
        %580 = vdwg.mxu0
        %v581 = vadd.f32 %v466, %v575
        %v582 = vadd.f32 %v467, %v578
        %583 = vst [vmem:[#allocation2] sm:$0xff] %v581
        %584 = vst [vmem:[#allocation2 + $0x8] sm:$0xff] %v582
        %v585 = vld [vmem:[#allocation3] sm:$0xff]
        %v586 = vld [vmem:[#allocation3 + $0x8] sm:$0xff]
        %v587 = vld [vmem:[%s389] sm:$0xf]
        %v588 = vld [vmem:[%s389 + $0x4] sm:$0xf]
        %v589 = vld [vmem:[#allocation10] sm:$0xf]
        %v590 = vld [vmem:[#allocation10 + $0x4] sm:$0xf]
        %v591 = vld [vmem:[#allocation10 + $0x8] sm:$0xf]
        %v592 = vld [vmem:[#allocation10 + $0xc] sm:$0xf]
        %v593 = vld [vmem:[#allocation10 + $0x10] sm:$0xf]
        %v594 = vld [vmem:[#allocation10 + $0x14] sm:$0xf]
        %v595 = vld [vmem:[#allocation10 + $0x18] sm:$0xf]
        %v596 = vld [vmem:[#allocation10 + $0x1c] sm:$0xf]
        %v597 = vld [vmem:[#allocation10 + $0x20] sm:$0xf]
        %v598 = vld [vmem:[#allocation10 + $0x24] sm:$0xf]
        %v599 = vld [vmem:[#allocation10 + $0x28] sm:$0xf]
        %v600 = vld [vmem:[#allocation10 + $0x2c] sm:$0xf]
        %v601 = vld [vmem:[#allocation10 + $0x30] sm:$0xf]
        %v602 = vld [vmem:[#allocation10 + $0x34] sm:$0xf]
        %v603 = vld [vmem:[#allocation10 + $0x38] sm:$0xf]
        %v604 = vld [vmem:[#allocation10 + $0x3c] sm:$0xf]
        %v607 = vunpack.c.l.b16 %v587
        %v608 = vunpack.c.l.b16 %v588
        %v609 = vpack.c.b16 %v608, %v607
        %v627 = vunpack.c.l.b16 %v589
        %v628 = vunpack.c.l.b16 %v590
        %v629 = vunpack.c.l.b16 %v591
        %v630 = vunpack.c.l.b16 %v592
        %v631 = vunpack.c.l.b16 %v593
        %v632 = vunpack.c.l.b16 %v594
        %v633 = vunpack.c.l.b16 %v595
        %v634 = vunpack.c.l.b16 %v596
        %v635 = vunpack.c.l.b16 %v597
        %v636 = vunpack.c.l.b16 %v598
        %v637 = vunpack.c.l.b16 %v599
        %v638 = vunpack.c.l.b16 %v600
        %v639 = vunpack.c.l.b16 %v601
        %v640 = vunpack.c.l.b16 %v602
        %v641 = vunpack.c.l.b16 %v603
        %v642 = vunpack.c.l.b16 %v604
        %v643 = vpack.c.b16 %v628, %v627
        %v644 = vpack.c.b16 %v630, %v629
        %v645 = vpack.c.b16 %v632, %v631
        %v646 = vpack.c.b16 %v634, %v633
        %v647 = vpack.c.b16 %v636, %v635
        %v648 = vpack.c.b16 %v638, %v637
        %v649 = vpack.c.b16 %v640, %v639
        %v650 = vpack.c.b16 %v642, %v641
        %659 = vmatprep.subr.bf16.mxu0 0
        %660 = vmatpush1.bf16.msra.mxu0 %v650
        %661 = vmatprep.subr.bf16.mxu0 0
        %662 = vmatpush1.bf16.msra.mxu0 %v649
        %663 = vmatprep.subr.bf16.mxu0 0
        %664 = vmatpush1.bf16.msra.mxu0 %v648
        %665 = vmatprep.subr.bf16.mxu0 0
        %666 = vmatpush1.bf16.msra.mxu0 %v647
        %667 = vmatprep.subr.bf16.mxu0 0
        %668 = vmatpush1.bf16.msra.mxu0 %v646
        %669 = vmatprep.subr.bf16.mxu0 0
        %670 = vmatpush1.bf16.msra.mxu0 %v645
        %671 = vmatprep.subr.bf16.mxu0 0
        %672 = vmatpush1.bf16.msra.mxu0 %v644
        %673 = vmatprep.subr.bf16.mxu0 0
        %674 = vmatpush1.bf16.msra.mxu0 %v643
        %675 = vmatprep.subr.bf16.mxu0 0
        %676 = vmatpush2.bf16.msra.mxu0 0
        %677 = vmatprep.subr.bf16.mxu0 0
        %678 = vmatpush2.bf16.msra.mxu0 0
        %679 = vmatprep.subr.bf16.mxu0 0
        %680 = vmatpush2.bf16.msra.mxu0 0
        %681 = vmatprep.subr.bf16.mxu0 0
        %682 = vmatpush2.bf16.msra.mxu0 0
        %683 = vmatprep.subr.bf16.mxu0 0
        %684 = vmatpush2.bf16.msra.mxu0 0
        %685 = vmatprep.subr.bf16.mxu0 0
        %686 = vmatpush2.bf16.msra.mxu0 0
        %687 = vmatprep.subr.bf16.mxu0 0
        %688 = vmatpush2.bf16.msra.mxu0 0
        %689 = vmatprep.subr.bf16.mxu0 0
        %690 = vmatpush2.bf16.msra.mxu0 0
        %691 = vmatprep.mubr.bf16.mxu0 0
        %692 = vmatmul.mubr.bf16.gmra.mxu0 %v609
        %v693 = vpop.f32.mrf.mxu0
        %v694 = vadd.f32 0.0, %v693
        %v695 = vpop.f32.mrf.mxu0
        %v696 = vpop.f32.mrf.mxu0
        %v697 = vadd.f32 0.0, %v696
        %v698 = vpop.f32.mrf.mxu0
        %699 = vdwg.mxu0
        %v700 = vadd.f32 %v585, %v694
        %v701 = vadd.f32 %v586, %v697
        %702 = vst [vmem:[#allocation3] sm:$0xff] %v700
        %703 = vst [vmem:[#allocation3 + $0x8] sm:$0xff] %v701
        // Predicated region
        $region77: #{tpu_custom_call.1} parent=47 // pred_check
          %p704 = pneg %p458
        $region78: #{tpu_custom_call.1} parent=47 // pred_check_branch
          %706 = sbr.rel (%p704) target = $region80
        $region79: #{tpu_custom_call.1} parent=47 // pred_region
          %v707 = vld [vmem:[#allocation3] sm:$0xff]
          %v708 = vld [vmem:[#allocation3 + $0x8] sm:$0xff]
          %v709 = vld [vmem:[%s406] sm:$0xff]
          %v710 = vld [vmem:[%s406 + $0x8] sm:$0xff]
          %v711 = vmul.f32 %v707, %v709
          %v712 = vmul.f32 %v708, %v710
          %v713 = vld [vmem:[#allocation2] sm:$0xff]
          %v714 = vld [vmem:[#allocation2 + $0x8] sm:$0xff]
          %v715 = vld [vmem:[#allocation13] sm:$0xff]
          %v716 = vld [vmem:[#allocation13 + $0x8] sm:$0xff]
          %v717 = vld [vmem:[#allocation13 + $0x10] sm:$0xff]
          %v718 = vld [vmem:[#allocation13 + $0x18] sm:$0xff]
          %v719 = vld [vmem:[#allocation13 + $0x20] sm:$0xff]
          %v720 = vld [vmem:[#allocation13 + $0x28] sm:$0xff]
          %v721 = vld [vmem:[#allocation13 + $0x30] sm:$0xff]
          %v722 = vld [vmem:[#allocation13 + $0x38] sm:$0xff]
          %v723 = vld [vmem:[#allocation13 + $0x40] sm:$0xff]
          %v724 = vld [vmem:[#allocation13 + $0x48] sm:$0xff]
          %v725 = vld [vmem:[#allocation13 + $0x50] sm:$0xff]
          %v726 = vld [vmem:[#allocation13 + $0x58] sm:$0xff]
          %v727 = vld [vmem:[#allocation13 + $0x60] sm:$0xff]
          %v728 = vld [vmem:[#allocation13 + $0x68] sm:$0xff]
          %v729 = vld [vmem:[#allocation13 + $0x70] sm:$0xff]
          %v730 = vld [vmem:[#allocation13 + $0x78] sm:$0xff]
          %v731 = vld [vmem:[#allocation13 + $0x80] sm:$0xff]
          %v732 = vld [vmem:[#allocation13 + $0x88] sm:$0xff]
          %v733 = vld [vmem:[#allocation13 + $0x90] sm:$0xff]
          %v734 = vld [vmem:[#allocation13 + $0x98] sm:$0xff]
          %v735 = vld [vmem:[#allocation13 + $0xa0] sm:$0xff]
          %v736 = vld [vmem:[#allocation13 + $0xa8] sm:$0xff]
          %v737 = vld [vmem:[#allocation13 + $0xb0] sm:$0xff]
          %v738 = vld [vmem:[#allocation13 + $0xb8] sm:$0xff]
          %v739 = vld [vmem:[#allocation13 + $0xc0] sm:$0xff]
          %v740 = vld [vmem:[#allocation13 + $0xc8] sm:$0xff]
          %v741 = vld [vmem:[#allocation13 + $0xd0] sm:$0xff]
          %v742 = vld [vmem:[#allocation13 + $0xd8] sm:$0xff]
          %v743 = vld [vmem:[#allocation13 + $0xe0] sm:$0xff]
          %v744 = vld [vmem:[#allocation13 + $0xe8] sm:$0xff]
          %v745 = vld [vmem:[#allocation13 + $0xf0] sm:$0xff]
          %v746 = vld [vmem:[#allocation13 + $0xf8] sm:$0xff]
          %747 = vmatprep.subr.mxu0 0.0
          %748 = vmatpush1.msra.mxu0 %v730
          %749 = vmatprep.subr.mxu0 0.0
          %750 = vmatpush1.msra.mxu0 %v729
          %751 = vmatprep.subr.mxu0 0.0
          %752 = vmatpush1.msra.mxu0 %v728
          %753 = vmatprep.subr.mxu0 0.0
          %754 = vmatpush1.msra.mxu0 %v727
          %755 = vmatprep.subr.mxu0 0.0
          %756 = vmatpush1.msra.mxu0 %v726
          %757 = vmatprep.subr.mxu0 0.0
          %758 = vmatpush1.msra.mxu0 %v725
          %759 = vmatprep.subr.mxu0 0.0
          %760 = vmatpush1.msra.mxu0 %v724
          %761 = vmatprep.subr.mxu0 0.0
          %762 = vmatpush1.msra.mxu0 %v723
          %763 = vmatprep.subr.mxu0 0.0
          %764 = vmatpush1.msra.mxu0 %v722
          %765 = vmatprep.subr.mxu0 0.0
          %766 = vmatpush1.msra.mxu0 %v721
          %767 = vmatprep.subr.mxu0 0.0
          %768 = vmatpush1.msra.mxu0 %v720
          %769 = vmatprep.subr.mxu0 0.0
          %770 = vmatpush1.msra.mxu0 %v719
          %771 = vmatprep.subr.mxu0 0.0
          %772 = vmatpush1.msra.mxu0 %v718
          %773 = vmatprep.subr.mxu0 0.0
          %774 = vmatpush1.msra.mxu0 %v717
          %775 = vmatprep.subr.mxu0 0.0
          %776 = vmatpush1.msra.mxu0 %v716
          %777 = vmatprep.subr.mxu0 0.0
          %778 = vmatpush1.msra.mxu0 %v715
          %779 = vmatprep.subr.mxu0 0.0
          %780 = vmatpush2.msra.mxu0 %v746
          %781 = vmatprep.subr.mxu0 0.0
          %782 = vmatpush2.msra.mxu0 %v745
          %783 = vmatprep.subr.mxu0 0.0
          %784 = vmatpush2.msra.mxu0 %v744
          %785 = vmatprep.subr.mxu0 0.0
          %786 = vmatpush2.msra.mxu0 %v743
          %787 = vmatprep.subr.mxu0 0.0
          %788 = vmatpush2.msra.mxu0 %v742
          %789 = vmatprep.subr.mxu0 0.0
          %790 = vmatpush2.msra.mxu0 %v741
          %791 = vmatprep.subr.mxu0 0.0
          %792 = vmatpush2.msra.mxu0 %v740
          %793 = vmatprep.subr.mxu0 0.0
          %794 = vmatpush2.msra.mxu0 %v739
          %795 = vmatprep.subr.mxu0 0.0
          %796 = vmatpush2.msra.mxu0 %v738
          %797 = vmatprep.subr.mxu0 0.0
          %798 = vmatpush2.msra.mxu0 %v737
          %799 = vmatprep.subr.mxu0 0.0
          %800 = vmatpush2.msra.mxu0 %v736
          %801 = vmatprep.subr.mxu0 0.0
          %802 = vmatpush2.msra.mxu0 %v735
          %803 = vmatprep.subr.mxu0 0.0
          %804 = vmatpush2.msra.mxu0 %v734
          %805 = vmatprep.subr.mxu0 0.0
          %806 = vmatpush2.msra.mxu0 %v733
          %807 = vmatprep.subr.mxu0 0.0
          %808 = vmatpush2.msra.mxu0 %v732
          %809 = vmatprep.subr.mxu0 0.0
          %810 = vmatpush2.msra.mxu0 %v731
          %811 = vmatprep.mubr.f32.mxu0 %v711
          %812 = vmatmul.mubr.f32.gmra.mxu0 %v707
          %v813 = vpop.f32.mrf.mxu0
          %v814 = vadd.f32 0.0, %v813
          %v815 = vpop.f32.mrf.mxu0
          %816 = vmatprep.mubr.f32.mxu0 %v712
          %817 = vmatmul.mubr.f32.gmra.mxu0 %v708
          %v818 = vpop.f32.mrf.mxu0
          %v819 = vadd.f32 0.0, %v818
          %v820 = vpop.f32.mrf.mxu0
          %821 = vdwg.mxu0
          %v822 = vadd.f32 %v713, %v814
          %v823 = vadd.f32 %v714, %v819
          %v824 = vld [vmem:[%s6] sm:$0x1]
          %v826 = vlaneseq
          %v827 = vshrl.u32 %v826, 7
          %v828 = vsub.s32 0, %v827
          %v829 = vrot.slane %v824, %v828
          %v831 = vadd.f32 %v822, %v829
          %v832 = vadd.f32 %v823, %v829
          %833 = vst [vmem:[%s450] sm:$0xff] %v831
          %834 = vst [vmem:[%s450 + $0x8] sm:$0xff] %v832
        $region80: #{tpu_custom_call.1} parent=47 // pred_fallthru
          _
        %s835 = sand.u32 %s224, 1
        %s836 = scalar_lea.sflag [#allocation6], %s835
        %s837 = sand.u32 %s224, 1
        %s838 = smul.addr %s837, 16
        %s839 = scalar_lea.vmem [#allocation14], %s838
        // Predicated region
        $region81: #{tpu_custom_call.1} parent=47 // pred_check
          %p840 = pneg %p234
        $region82: #{tpu_custom_call.1} parent=47 // pred_check_branch
          %842 = sbr.rel (%p840) target = $region84
        $region83: #{tpu_custom_call.1} parent=47 // pred_region
          %s843 = smul.u32 2, %s32
          %s845 = ssub.s32 256, 256
          %846 = vsyncadd %s836, %s845
          %s847 = smul.addr %s843, 128
          %s848 = scalar_lea.hbm %s7, %s847
          %s849 = sshll.u32 %s839, 4
          %s850 = int_to_ptr.vmem [resolvable:$true] %s849
          %855 = dma.vmem_to_hbm [thread:$0]  %s850, 256, %s848, %s836, 128, 128, 8
        $region84: #{tpu_custom_call.1} parent=47 // pred_fallthru
          _
      $region48: #{tpu_custom_call.1} parent=5 // pred_fallthru
        _
      %p856 = scmp.le.s32.totalorder 2, %s23
      // Predicated region
      $region85: #{tpu_custom_call.1} parent=5 // pred_check
        %p857 = pneg %p856
      $region86: #{tpu_custom_call.1} parent=5 // pred_check_branch
        %859 = sbr.rel (%p857) target = $region88
      $region87: #{tpu_custom_call.1} parent=5 // pred_region
        %s860 = ssub.s32 %s23, 2
        // Predicated region
        $region89: #{tpu_custom_call.1} parent=87 // pred_check
          %p861 = pneg %p240
        $region90: #{tpu_custom_call.1} parent=87 // pred_check_branch
          %863 = sbr.rel (%p861) target = $region92
        $region91: #{tpu_custom_call.1} parent=87 // pred_region
          %s864 = sand.u32 %s225, 1
          %s865 = scalar_lea.sflag [#allocation6], %s864
          %s866 = sand.u32 %s225, 1
          %s867 = smul.addr %s866, 16
          %s868 = scalar_lea.vmem [#allocation14], %s867
          %869 = dma.done %s865, 256
        $region92: #{tpu_custom_call.1} parent=87 // pred_fallthru
          _
      $region88: #{tpu_custom_call.1} parent=5 // pred_fallthru
        _
    $region6: #{tpu_custom_call.1} parent=1 // loop_footer
      %s27 = sadd.s32 1, %s23
    $region7: #{tpu_custom_call.1} parent=1 // loop_footer_branch
      %22 = sbr.rel target = $region3
    $region8: #{tpu_custom_call.1} parent=1 // loop_exit
      _
    %870 = vsyncpa [#allocation5], 1
    %s871 = scalar_lea.sflag [#allocation5], 1
    %872 = vsyncpa %s871, 1
    %873 = vsyncpa [#allocation8], 1
    %s874 = scalar_lea.sflag [#allocation8], 1
    %875 = vsyncpa %s874, 1
    %876 = vsyncpa [#allocation11], 1
    %877 = vsyncpa [#allocation6], 1
    %s878 = scalar_lea.sflag [#allocation6], 1
    %879 = vsyncpa %s878, 1

</llo_original>
